<compile_context>
chip_gen: v7x
topology: tpu7x:2x2x1
jax: 0.10.0
libtpu: 0.0.40
codegen_flags: <defaults>
</compile_context>

<pallas_src>
import jax
import jax.numpy as jnp
import numpy as np
from jax.experimental import pallas as pl
from jax.experimental.pallas import tpu as pltpu


def gru_encoder_kernel(ids_ref, w_comb_ref, w_hh_ref, b_ih_ref, b_hh_ref,
                       out_ref):
    # ids_ref:    (S, 1)  int32 token ids (VMEM)
    # w_comb_ref: (V, 3H) fused  embedding @ W_ih  (gate order [r, z, n])
    # w_hh_ref:   (H, 3H) fused hidden-to-hidden weights
    # b_*_ref:    (1, 3H) fused biases
    # out_ref:    (1, S*H) lane-dense per-step hidden states (row-major: step t
    #             occupies columns [t*H, (t+1)*H))
    S = ids_ref.shape[0]
    V = w_comb_ref.shape[0]
    H = w_hh_ref.shape[0]

    # --- embedding gather + input projection fused into ONE matmul ------------
    # one_hot: (S, V); W_comb already contains embedding @ W_ih, so
    # x_gates[t] = W_ih^T . embedding[ids[t]] + b_ih  for every timestep at once.
    ids = ids_ref[...]                                               # (S, 1)
    vocab_iota = jax.lax.broadcasted_iota(jnp.int32, (S, V), 1)      # (S, V)
    one_hot = (vocab_iota == ids).astype(jnp.float32)                # (S, V)
    x_gates = jnp.dot(one_hot, w_comb_ref[...],
                      preferred_element_type=jnp.float32) + b_ih_ref[...]   # (S, 3H)

    w_hh = w_hh_ref[...]                                             # (H, 3H)
    b_hh = b_hh_ref[...]                                             # (1, 3H)

    # --- recurrence: S is small and static, fully unrolled ---------------------
    h = jnp.zeros((1, H), jnp.float32)
    hs = []
    for t in range(S):
        g_h = jnp.dot(h, w_hh, preferred_element_type=jnp.float32) + b_hh  # (1, 3H)
        g_x = x_gates[t:t + 1, :]                                          # (1, 3H)
        # PyTorch GRU equations, gate order [r, z, n].
        # r and z share a single fused sigmoid (one EUP push per step).
        rz = jax.nn.sigmoid(g_x[:, 0:2 * H] + g_h[:, 0:2 * H])             # (1, 2H)
        r = rz[:, 0:H]
        z = rz[:, H:2 * H]
        n = jnp.tanh(g_x[:, 2 * H:3 * H] + r * g_h[:, 2 * H:3 * H])
        # h = (1-z)*n + z*h  rewritten with one fewer VALU op:
        h = n + z * (h - n)
        hs.append(h)

    # Single lane-dense store of all per-step hiddens.
    out_ref[...] = jnp.concatenate(hs, axis=1)                       # (1, S*H)


def prepare_params(embedding, w_ih, w_hh, b_ih, b_hh):
    """One-time weight preparation (NOT on the per-call path).

    embedding: (V, I)
    w_ih: (3, I, H), w_hh: (3, H, H), b_ih/b_hh: (3, 1, H)  -- gate order [r, z, n]
    Returns fused tensors consumed directly by the kernel.
    """
    V, I = embedding.shape
    H = w_hh.shape[-1]
    w_ih_f = jnp.transpose(w_ih, (1, 0, 2)).reshape(I, 3 * H)   # (I, 3H)
    w_hh_f = jnp.transpose(w_hh, (1, 0, 2)).reshape(H, 3 * H)   # (H, 3H)
    b_ih_f = jnp.transpose(b_ih, (1, 0, 2)).reshape(1, 3 * H)   # (1, 3H)
    b_hh_f = jnp.transpose(b_hh, (1, 0, 2)).reshape(1, 3 * H)   # (1, 3H)
    # Fold the embedding table into the input projection: (V, I) @ (I, 3H).
    w_comb = jnp.dot(embedding, w_ih_f,
                     preferred_element_type=jnp.float32)        # (V, 3H)
    return w_comb, w_hh_f, b_ih_f, b_hh_f


def encoder_forward(token_ids, w_comb, w_hh_f, b_ih_f, b_hh_f):
    """Per-call path: only the pallas_call plus a view-style reshape."""
    S = token_ids.shape[0]
    H = w_hh_f.shape[0]
    ids2d = token_ids.astype(jnp.int32).reshape(S, 1)

    # TODO(synk): for multi-sequence workloads add a leading batch grid axis with
    # dimension_semantics=("parallel",) so v7x's second TensorCore is used.
    out_flat = pl.pallas_call(
        gru_encoder_kernel,
        out_shape=jax.ShapeDtypeStruct((1, S * H), jnp.float32),
        in_specs=[pl.BlockSpec(memory_space=pltpu.MemorySpace.VMEM)
                  for _ in range(5)],
        out_specs=pl.BlockSpec(memory_space=pltpu.MemorySpace.VMEM),
    )(ids2d, w_comb, w_hh_f, b_ih_f, b_hh_f)

    output = out_flat.reshape(S, 1, H)             # (S, B=1, H) like torch.nn.GRU
    hidden = output[S - 1:S]                       # (1, 1, H) == output[-1]
    return output, hidden


def encoder_reference(token_ids, embedding, w_ih, w_hh, b_ih, b_hh):
    """Pure-JAX reference matching torch.nn.Embedding + torch.nn.GRU semantics."""
    H = w_hh.shape[-1]
    xs = embedding[token_ids]            # (S, I)

    def step(h, x):
        x = x[None, :]                   # (1, I)
        r = jax.nn.sigmoid(x @ w_ih[0] + b_ih[0] + h @ w_hh[0] + b_hh[0])
        z = jax.nn.sigmoid(x @ w_ih[1] + b_ih[1] + h @ w_hh[1] + b_hh[1])
        n = jnp.tanh(x @ w_ih[2] + b_ih[2] + r * (h @ w_hh[2] + b_hh[2]))
        h_new = (1.0 - z) * n + z * h
        return h_new, h_new

    h0 = jnp.zeros((1, H), jnp.float32)
    h_last, ys = jax.lax.scan(step, h0, xs)
    return ys, h_last[None]              # (S, 1, H), (1, 1, H)


if __name__ == "__main__":
    # Small shapes consistent with the module: vocab=13, input_size=16,
    # hidden_size=32, sequence length=8, batch_size=1.
    VOCAB, INPUT_SIZE, HIDDEN_SIZE, SEQ_LEN = 13, 16, 32, 8

    key = jax.random.PRNGKey(0)
    k_emb, k_wih, k_whh, k_bih, k_bhh, k_ids = jax.random.split(key, 6)

    # Deterministic parameter init (shapes from nn.Embedding / nn.GRU __init__).
    # nn.Embedding: N(0, 1); nn.GRU: U(-1/sqrt(H), 1/sqrt(H)).
    embedding = jax.random.normal(k_emb, (VOCAB, INPUT_SIZE), jnp.float32)
    bound = 1.0 / np.sqrt(HIDDEN_SIZE)
    w_ih = jax.random.uniform(k_wih, (3, INPUT_SIZE, HIDDEN_SIZE), jnp.float32,
                              -bound, bound)
    w_hh = jax.random.uniform(k_whh, (3, HIDDEN_SIZE, HIDDEN_SIZE), jnp.float32,
                              -bound, bound)
    b_ih = jax.random.uniform(k_bih, (3, 1, HIDDEN_SIZE), jnp.float32,
                              -bound, bound)
    b_hh = jax.random.uniform(k_bhh, (3, 1, HIDDEN_SIZE), jnp.float32,
                              -bound, bound)

    token_ids = jax.random.randint(k_ids, (SEQ_LEN,), 0, VOCAB, jnp.int32)

    # One-time weight prep (hoisted off the per-call path).
    fused = jax.block_until_ready(
        prepare_params(embedding, w_ih, w_hh, b_ih, b_hh))

    out, hidden = encoder_forward(token_ids, *fused)
    out, hidden = jax.block_until_ready((out, hidden))

    ref_out, ref_hidden = encoder_reference(token_ids, embedding, w_ih, w_hh,
                                            b_ih, b_hh)
    np.testing.assert_allclose(np.asarray(out), np.asarray(ref_out),
                               rtol=1e-5, atol=1e-5)
    np.testing.assert_allclose(np.asarray(hidden), np.asarray(ref_hidden),
                               rtol=1e-5, atol=1e-5)
    assert out.shape == (SEQ_LEN, 1, HIDDEN_SIZE)
    assert hidden.shape == (1, 1, HIDDEN_SIZE)

    print("KERNEL_OK")
</pallas_src>

<mosaic_0001>
module attributes {stable_mosaic.version = 11 : i64} {
  func.func @gru_encoder_kernel(%arg0: memref<8x1xi32, #tpu.memory_space<vmem>>, %arg1: memref<13x96xf32, #tpu.memory_space<vmem>>, %arg2: memref<32x96xf32, #tpu.memory_space<vmem>>, %arg3: memref<1x96xf32, #tpu.memory_space<vmem>>, %arg4: memref<1x96xf32, #tpu.memory_space<vmem>>, %arg5: memref<1x256xf32, #tpu.memory_space<vmem>>) attributes {dimension_semantics = [], scalar_prefetch = 0 : i64, scratch_operands = 0 : i64, tpu.core_type = #tpu.core_type<tc>} {
    %c0 = arith.constant 0 : index
    %c0_0 = arith.constant 0 : index
    %0 = vector.load %arg0[%c0, %c0_0] : memref<8x1xi32, #tpu.memory_space<vmem>>, vector<8x1xi32>
    %1 = tpu.iota {dimensions = array<i32: 1>} : vector<8x13xi32>
    %2 = vector.broadcast %0 : vector<8x1xi32> to vector<8x13xi32>
    %3 = arith.cmpi eq, %1, %2 : vector<8x13xi32>
    %4 = arith.extui %3 : vector<8x13xi1> to vector<8x13xi32>
    %5 = arith.sitofp %4 : vector<8x13xi32> to vector<8x13xf32>
    %c0_1 = arith.constant 0 : index
    %c0_2 = arith.constant 0 : index
    %6 = vector.load %arg1[%c0_1, %c0_2] : memref<13x96xf32, #tpu.memory_space<vmem>>, vector<13x96xf32>
    %cst = arith.constant dense<0.000000e+00> : vector<8x96xf32>
    %7 = tpu.matmul %5, %6, %cst {dimension_numbers = #tpu.dot_dimension_numbers<[1], [0], [0], [1], [0, 0, 1, 1], [], []>} : vector<8x13xf32>, vector<13x96xf32>, vector<8x96xf32> -> vector<8x96xf32>
    %c0_3 = arith.constant 0 : index
    %c0_4 = arith.constant 0 : index
    %8 = vector.load %arg3[%c0_3, %c0_4] : memref<1x96xf32, #tpu.memory_space<vmem>>, vector<1x96xf32>
    %9 = vector.broadcast %8 : vector<1x96xf32> to vector<8x96xf32>
    %10 = arith.addf %7, %9 : vector<8x96xf32>
    %c0_5 = arith.constant 0 : index
    %c0_6 = arith.constant 0 : index
    %11 = vector.load %arg2[%c0_5, %c0_6] : memref<32x96xf32, #tpu.memory_space<vmem>>, vector<32x96xf32>
    %c0_7 = arith.constant 0 : index
    %c0_8 = arith.constant 0 : index
    %12 = vector.load %arg4[%c0_7, %c0_8] : memref<1x96xf32, #tpu.memory_space<vmem>>, vector<1x96xf32>
    %cst_9 = arith.constant 0.000000e+00 : f32
    %13 = vector.broadcast %cst_9 : f32 to vector<1x32xf32>
    %cst_10 = arith.constant dense<0.000000e+00> : vector<1x96xf32>
    %14 = tpu.matmul %13, %11, %cst_10 {dimension_numbers = #tpu.dot_dimension_numbers<[1], [0], [0], [1], [0, 0, 1, 1], [], []>} : vector<1x32xf32>, vector<32x96xf32>, vector<1x96xf32> -> vector<1x96xf32>
    %15 = arith.addf %14, %12 : vector<1x96xf32>
    %16 = vector.extract_strided_slice %10 {offsets = [0, 0], sizes = [1, 96], strides = [1, 1]} : vector<8x96xf32> to vector<1x96xf32>
    %17 = vector.extract_strided_slice %16 {offsets = [0, 0], sizes = [1, 64], strides = [1, 1]} : vector<1x96xf32> to vector<1x64xf32>
    %18 = vector.extract_strided_slice %15 {offsets = [0, 0], sizes = [1, 64], strides = [1, 1]} : vector<1x96xf32> to vector<1x64xf32>
    %19 = arith.addf %17, %18 : vector<1x64xf32>
    %20 = arith.negf %19 : vector<1x64xf32>
    %21 = math.exp %20 : vector<1x64xf32>
    %cst_11 = arith.constant 1.000000e+00 : f32
    %22 = vector.broadcast %cst_11 : f32 to vector<1x64xf32>
    %23 = arith.addf %22, %21 : vector<1x64xf32>
    %24 = arith.divf %22, %23 : vector<1x64xf32>
    %25 = vector.extract_strided_slice %24 {offsets = [0, 0], sizes = [1, 32], strides = [1, 1]} : vector<1x64xf32> to vector<1x32xf32>
    %26 = vector.extract_strided_slice %24 {offsets = [0, 32], sizes = [1, 32], strides = [1, 1]} : vector<1x64xf32> to vector<1x32xf32>
    %27 = vector.extract_strided_slice %16 {offsets = [0, 64], sizes = [1, 32], strides = [1, 1]} : vector<1x96xf32> to vector<1x32xf32>
    %28 = vector.extract_strided_slice %15 {offsets = [0, 64], sizes = [1, 32], strides = [1, 1]} : vector<1x96xf32> to vector<1x32xf32>
    %29 = arith.mulf %25, %28 : vector<1x32xf32>
    %30 = arith.addf %27, %29 : vector<1x32xf32>
    %31 = math.tanh %30 : vector<1x32xf32>
    %32 = arith.subf %13, %31 : vector<1x32xf32>
    %33 = arith.mulf %26, %32 : vector<1x32xf32>
    %34 = arith.addf %31, %33 : vector<1x32xf32>
    %cst_12 = arith.constant dense<0.000000e+00> : vector<1x96xf32>
    %35 = tpu.matmul %34, %11, %cst_12 {dimension_numbers = #tpu.dot_dimension_numbers<[1], [0], [0], [1], [0, 0, 1, 1], [], []>} : vector<1x32xf32>, vector<32x96xf32>, vector<1x96xf32> -> vector<1x96xf32>
    %36 = arith.addf %35, %12 : vector<1x96xf32>
    %37 = vector.extract_strided_slice %10 {offsets = [1, 0], sizes = [1, 96], strides = [1, 1]} : vector<8x96xf32> to vector<1x96xf32>
    %38 = vector.extract_strided_slice %37 {offsets = [0, 0], sizes = [1, 64], strides = [1, 1]} : vector<1x96xf32> to vector<1x64xf32>
    %39 = vector.extract_strided_slice %36 {offsets = [0, 0], sizes = [1, 64], strides = [1, 1]} : vector<1x96xf32> to vector<1x64xf32>
    %40 = arith.addf %38, %39 : vector<1x64xf32>
    %41 = arith.negf %40 : vector<1x64xf32>
    %42 = math.exp %41 : vector<1x64xf32>
    %cst_13 = arith.constant 1.000000e+00 : f32
    %43 = vector.broadcast %cst_13 : f32 to vector<1x64xf32>
    %44 = arith.addf %43, %42 : vector<1x64xf32>
    %45 = arith.divf %43, %44 : vector<1x64xf32>
    %46 = vector.extract_strided_slice %45 {offsets = [0, 0], sizes = [1, 32], strides = [1, 1]} : vector<1x64xf32> to vector<1x32xf32>
    %47 = vector.extract_strided_slice %45 {offsets = [0, 32], sizes = [1, 32], strides = [1, 1]} : vector<1x64xf32> to vector<1x32xf32>
    %48 = vector.extract_strided_slice %37 {offsets = [0, 64], sizes = [1, 32], strides = [1, 1]} : vector<1x96xf32> to vector<1x32xf32>
    %49 = vector.extract_strided_slice %36 {offsets = [0, 64], sizes = [1, 32], strides = [1, 1]} : vector<1x96xf32> to vector<1x32xf32>
    %50 = arith.mulf %46, %49 : vector<1x32xf32>
    %51 = arith.addf %48, %50 : vector<1x32xf32>
    %52 = math.tanh %51 : vector<1x32xf32>
    %53 = arith.subf %34, %52 : vector<1x32xf32>
    %54 = arith.mulf %47, %53 : vector<1x32xf32>
    %55 = arith.addf %52, %54 : vector<1x32xf32>
    %cst_14 = arith.constant dense<0.000000e+00> : vector<1x96xf32>
    %56 = tpu.matmul %55, %11, %cst_14 {dimension_numbers = #tpu.dot_dimension_numbers<[1], [0], [0], [1], [0, 0, 1, 1], [], []>} : vector<1x32xf32>, vector<32x96xf32>, vector<1x96xf32> -> vector<1x96xf32>
    %57 = arith.addf %56, %12 : vector<1x96xf32>
    %58 = vector.extract_strided_slice %10 {offsets = [2, 0], sizes = [1, 96], strides = [1, 1]} : vector<8x96xf32> to vector<1x96xf32>
    %59 = vector.extract_strided_slice %58 {offsets = [0, 0], sizes = [1, 64], strides = [1, 1]} : vector<1x96xf32> to vector<1x64xf32>
    %60 = vector.extract_strided_slice %57 {offsets = [0, 0], sizes = [1, 64], strides = [1, 1]} : vector<1x96xf32> to vector<1x64xf32>
    %61 = arith.addf %59, %60 : vector<1x64xf32>
    %62 = arith.negf %61 : vector<1x64xf32>
    %63 = math.exp %62 : vector<1x64xf32>
    %cst_15 = arith.constant 1.000000e+00 : f32
    %64 = vector.broadcast %cst_15 : f32 to vector<1x64xf32>
    %65 = arith.addf %64, %63 : vector<1x64xf32>
    %66 = arith.divf %64, %65 : vector<1x64xf32>
    %67 = vector.extract_strided_slice %66 {offsets = [0, 0], sizes = [1, 32], strides = [1, 1]} : vector<1x64xf32> to vector<1x32xf32>
    %68 = vector.extract_strided_slice %66 {offsets = [0, 32], sizes = [1, 32], strides = [1, 1]} : vector<1x64xf32> to vector<1x32xf32>
    %69 = vector.extract_strided_slice %58 {offsets = [0, 64], sizes = [1, 32], strides = [1, 1]} : vector<1x96xf32> to vector<1x32xf32>
    %70 = vector.extract_strided_slice %57 {offsets = [0, 64], sizes = [1, 32], strides = [1, 1]} : vector<1x96xf32> to vector<1x32xf32>
    %71 = arith.mulf %67, %70 : vector<1x32xf32>
    %72 = arith.addf %69, %71 : vector<1x32xf32>
    %73 = math.tanh %72 : vector<1x32xf32>
    %74 = arith.subf %55, %73 : vector<1x32xf32>
    %75 = arith.mulf %68, %74 : vector<1x32xf32>
    %76 = arith.addf %73, %75 : vector<1x32xf32>
    %cst_16 = arith.constant dense<0.000000e+00> : vector<1x96xf32>
    %77 = tpu.matmul %76, %11, %cst_16 {dimension_numbers = #tpu.dot_dimension_numbers<[1], [0], [0], [1], [0, 0, 1, 1], [], []>} : vector<1x32xf32>, vector<32x96xf32>, vector<1x96xf32> -> vector<1x96xf32>
    %78 = arith.addf %77, %12 : vector<1x96xf32>
    %79 = vector.extract_strided_slice %10 {offsets = [3, 0], sizes = [1, 96], strides = [1, 1]} : vector<8x96xf32> to vector<1x96xf32>
    %80 = vector.extract_strided_slice %79 {offsets = [0, 0], sizes = [1, 64], strides = [1, 1]} : vector<1x96xf32> to vector<1x64xf32>
    %81 = vector.extract_strided_slice %78 {offsets = [0, 0], sizes = [1, 64], strides = [1, 1]} : vector<1x96xf32> to vector<1x64xf32>
    %82 = arith.addf %80, %81 : vector<1x64xf32>
    %83 = arith.negf %82 : vector<1x64xf32>
    %84 = math.exp %83 : vector<1x64xf32>
    %cst_17 = arith.constant 1.000000e+00 : f32
    %85 = vector.broadcast %cst_17 : f32 to vector<1x64xf32>
    %86 = arith.addf %85, %84 : vector<1x64xf32>
    %87 = arith.divf %85, %86 : vector<1x64xf32>
    %88 = vector.extract_strided_slice %87 {offsets = [0, 0], sizes = [1, 32], strides = [1, 1]} : vector<1x64xf32> to vector<1x32xf32>
    %89 = vector.extract_strided_slice %87 {offsets = [0, 32], sizes = [1, 32], strides = [1, 1]} : vector<1x64xf32> to vector<1x32xf32>
    %90 = vector.extract_strided_slice %79 {offsets = [0, 64], sizes = [1, 32], strides = [1, 1]} : vector<1x96xf32> to vector<1x32xf32>
    %91 = vector.extract_strided_slice %78 {offsets = [0, 64], sizes = [1, 32], strides = [1, 1]} : vector<1x96xf32> to vector<1x32xf32>
    %92 = arith.mulf %88, %91 : vector<1x32xf32>
    %93 = arith.addf %90, %92 : vector<1x32xf32>
    %94 = math.tanh %93 : vector<1x32xf32>
    %95 = arith.subf %76, %94 : vector<1x32xf32>
    %96 = arith.mulf %89, %95 : vector<1x32xf32>
    %97 = arith.addf %94, %96 : vector<1x32xf32>
    %cst_18 = arith.constant dense<0.000000e+00> : vector<1x96xf32>
    %98 = tpu.matmul %97, %11, %cst_18 {dimension_numbers = #tpu.dot_dimension_numbers<[1], [0], [0], [1], [0, 0, 1, 1], [], []>} : vector<1x32xf32>, vector<32x96xf32>, vector<1x96xf32> -> vector<1x96xf32>
    %99 = arith.addf %98, %12 : vector<1x96xf32>
    %100 = vector.extract_strided_slice %10 {offsets = [4, 0], sizes = [1, 96], strides = [1, 1]} : vector<8x96xf32> to vector<1x96xf32>
    %101 = vector.extract_strided_slice %100 {offsets = [0, 0], sizes = [1, 64], strides = [1, 1]} : vector<1x96xf32> to vector<1x64xf32>
    %102 = vector.extract_strided_slice %99 {offsets = [0, 0], sizes = [1, 64], strides = [1, 1]} : vector<1x96xf32> to vector<1x64xf32>
    %103 = arith.addf %101, %102 : vector<1x64xf32>
    %104 = arith.negf %103 : vector<1x64xf32>
    %105 = math.exp %104 : vector<1x64xf32>
    %cst_19 = arith.constant 1.000000e+00 : f32
    %106 = vector.broadcast %cst_19 : f32 to vector<1x64xf32>
    %107 = arith.addf %106, %105 : vector<1x64xf32>
    %108 = arith.divf %106, %107 : vector<1x64xf32>
    %109 = vector.extract_strided_slice %108 {offsets = [0, 0], sizes = [1, 32], strides = [1, 1]} : vector<1x64xf32> to vector<1x32xf32>
    %110 = vector.extract_strided_slice %108 {offsets = [0, 32], sizes = [1, 32], strides = [1, 1]} : vector<1x64xf32> to vector<1x32xf32>
    %111 = vector.extract_strided_slice %100 {offsets = [0, 64], sizes = [1, 32], strides = [1, 1]} : vector<1x96xf32> to vector<1x32xf32>
    %112 = vector.extract_strided_slice %99 {offsets = [0, 64], sizes = [1, 32], strides = [1, 1]} : vector<1x96xf32> to vector<1x32xf32>
    %113 = arith.mulf %109, %112 : vector<1x32xf32>
    %114 = arith.addf %111, %113 : vector<1x32xf32>
    %115 = math.tanh %114 : vector<1x32xf32>
    %116 = arith.subf %97, %115 : vector<1x32xf32>
    %117 = arith.mulf %110, %116 : vector<1x32xf32>
    %118 = arith.addf %115, %117 : vector<1x32xf32>
    %cst_20 = arith.constant dense<0.000000e+00> : vector<1x96xf32>
    %119 = tpu.matmul %118, %11, %cst_20 {dimension_numbers = #tpu.dot_dimension_numbers<[1], [0], [0], [1], [0, 0, 1, 1], [], []>} : vector<1x32xf32>, vector<32x96xf32>, vector<1x96xf32> -> vector<1x96xf32>
    %120 = arith.addf %119, %12 : vector<1x96xf32>
    %121 = vector.extract_strided_slice %10 {offsets = [5, 0], sizes = [1, 96], strides = [1, 1]} : vector<8x96xf32> to vector<1x96xf32>
    %122 = vector.extract_strided_slice %121 {offsets = [0, 0], sizes = [1, 64], strides = [1, 1]} : vector<1x96xf32> to vector<1x64xf32>
    %123 = vector.extract_strided_slice %120 {offsets = [0, 0], sizes = [1, 64], strides = [1, 1]} : vector<1x96xf32> to vector<1x64xf32>
    %124 = arith.addf %122, %123 : vector<1x64xf32>
    %125 = arith.negf %124 : vector<1x64xf32>
    %126 = math.exp %125 : vector<1x64xf32>
    %cst_21 = arith.constant 1.000000e+00 : f32
    %127 = vector.broadcast %cst_21 : f32 to vector<1x64xf32>
    %128 = arith.addf %127, %126 : vector<1x64xf32>
    %129 = arith.divf %127, %128 : vector<1x64xf32>
    %130 = vector.extract_strided_slice %129 {offsets = [0, 0], sizes = [1, 32], strides = [1, 1]} : vector<1x64xf32> to vector<1x32xf32>
    %131 = vector.extract_strided_slice %129 {offsets = [0, 32], sizes = [1, 32], strides = [1, 1]} : vector<1x64xf32> to vector<1x32xf32>
    %132 = vector.extract_strided_slice %121 {offsets = [0, 64], sizes = [1, 32], strides = [1, 1]} : vector<1x96xf32> to vector<1x32xf32>
    %133 = vector.extract_strided_slice %120 {offsets = [0, 64], sizes = [1, 32], strides = [1, 1]} : vector<1x96xf32> to vector<1x32xf32>
    %134 = arith.mulf %130, %133 : vector<1x32xf32>
    %135 = arith.addf %132, %134 : vector<1x32xf32>
    %136 = math.tanh %135 : vector<1x32xf32>
    %137 = arith.subf %118, %136 : vector<1x32xf32>
    %138 = arith.mulf %131, %137 : vector<1x32xf32>
    %139 = arith.addf %136, %138 : vector<1x32xf32>
    %cst_22 = arith.constant dense<0.000000e+00> : vector<1x96xf32>
    %140 = tpu.matmul %139, %11, %cst_22 {dimension_numbers = #tpu.dot_dimension_numbers<[1], [0], [0], [1], [0, 0, 1, 1], [], []>} : vector<1x32xf32>, vector<32x96xf32>, vector<1x96xf32> -> vector<1x96xf32>
    %141 = arith.addf %140, %12 : vector<1x96xf32>
    %142 = vector.extract_strided_slice %10 {offsets = [6, 0], sizes = [1, 96], strides = [1, 1]} : vector<8x96xf32> to vector<1x96xf32>
    %143 = vector.extract_strided_slice %142 {offsets = [0, 0], sizes = [1, 64], strides = [1, 1]} : vector<1x96xf32> to vector<1x64xf32>
    %144 = vector.extract_strided_slice %141 {offsets = [0, 0], sizes = [1, 64], strides = [1, 1]} : vector<1x96xf32> to vector<1x64xf32>
    %145 = arith.addf %143, %144 : vector<1x64xf32>
    %146 = arith.negf %145 : vector<1x64xf32>
    %147 = math.exp %146 : vector<1x64xf32>
    %cst_23 = arith.constant 1.000000e+00 : f32
    %148 = vector.broadcast %cst_23 : f32 to vector<1x64xf32>
    %149 = arith.addf %148, %147 : vector<1x64xf32>
    %150 = arith.divf %148, %149 : vector<1x64xf32>
    %151 = vector.extract_strided_slice %150 {offsets = [0, 0], sizes = [1, 32], strides = [1, 1]} : vector<1x64xf32> to vector<1x32xf32>
    %152 = vector.extract_strided_slice %150 {offsets = [0, 32], sizes = [1, 32], strides = [1, 1]} : vector<1x64xf32> to vector<1x32xf32>
    %153 = vector.extract_strided_slice %142 {offsets = [0, 64], sizes = [1, 32], strides = [1, 1]} : vector<1x96xf32> to vector<1x32xf32>
    %154 = vector.extract_strided_slice %141 {offsets = [0, 64], sizes = [1, 32], strides = [1, 1]} : vector<1x96xf32> to vector<1x32xf32>
    %155 = arith.mulf %151, %154 : vector<1x32xf32>
    %156 = arith.addf %153, %155 : vector<1x32xf32>
    %157 = math.tanh %156 : vector<1x32xf32>
    %158 = arith.subf %139, %157 : vector<1x32xf32>
    %159 = arith.mulf %152, %158 : vector<1x32xf32>
    %160 = arith.addf %157, %159 : vector<1x32xf32>
    %cst_24 = arith.constant dense<0.000000e+00> : vector<1x96xf32>
    %161 = tpu.matmul %160, %11, %cst_24 {dimension_numbers = #tpu.dot_dimension_numbers<[1], [0], [0], [1], [0, 0, 1, 1], [], []>} : vector<1x32xf32>, vector<32x96xf32>, vector<1x96xf32> -> vector<1x96xf32>
    %162 = arith.addf %161, %12 : vector<1x96xf32>
    %163 = vector.extract_strided_slice %10 {offsets = [7, 0], sizes = [1, 96], strides = [1, 1]} : vector<8x96xf32> to vector<1x96xf32>
    %164 = vector.extract_strided_slice %163 {offsets = [0, 0], sizes = [1, 64], strides = [1, 1]} : vector<1x96xf32> to vector<1x64xf32>
    %165 = vector.extract_strided_slice %162 {offsets = [0, 0], sizes = [1, 64], strides = [1, 1]} : vector<1x96xf32> to vector<1x64xf32>
    %166 = arith.addf %164, %165 : vector<1x64xf32>
    %167 = arith.negf %166 : vector<1x64xf32>
    %168 = math.exp %167 : vector<1x64xf32>
    %cst_25 = arith.constant 1.000000e+00 : f32
    %169 = vector.broadcast %cst_25 : f32 to vector<1x64xf32>
    %170 = arith.addf %169, %168 : vector<1x64xf32>
    %171 = arith.divf %169, %170 : vector<1x64xf32>
    %172 = vector.extract_strided_slice %171 {offsets = [0, 0], sizes = [1, 32], strides = [1, 1]} : vector<1x64xf32> to vector<1x32xf32>
    %173 = vector.extract_strided_slice %171 {offsets = [0, 32], sizes = [1, 32], strides = [1, 1]} : vector<1x64xf32> to vector<1x32xf32>
    %174 = vector.extract_strided_slice %163 {offsets = [0, 64], sizes = [1, 32], strides = [1, 1]} : vector<1x96xf32> to vector<1x32xf32>
    %175 = vector.extract_strided_slice %162 {offsets = [0, 64], sizes = [1, 32], strides = [1, 1]} : vector<1x96xf32> to vector<1x32xf32>
    %176 = arith.mulf %172, %175 : vector<1x32xf32>
    %177 = arith.addf %174, %176 : vector<1x32xf32>
    %178 = math.tanh %177 : vector<1x32xf32>
    %179 = arith.subf %160, %178 : vector<1x32xf32>
    %180 = arith.mulf %173, %179 : vector<1x32xf32>
    %181 = arith.addf %178, %180 : vector<1x32xf32>
    %182 = tpu.concatenate %34, %55, %76, %97, %118, %139, %160, %181 in 1 : vector<1x32xf32>, vector<1x32xf32>, vector<1x32xf32>, vector<1x32xf32>, vector<1x32xf32>, vector<1x32xf32>, vector<1x32xf32>, vector<1x32xf32> -> vector<1x256xf32>
    %c0_26 = arith.constant 0 : index
    %c0_27 = arith.constant 0 : index
    %183 = vector.load %arg5[%c0_26, %c0_27] : memref<1x256xf32, #tpu.memory_space<vmem>>, vector<1x256xf32>
    tpu.vector_store %arg5[%c0_26, %c0_27], %182 {strides = array<i32>} : memref<1x256xf32, #tpu.memory_space<vmem>>, vector<1x256xf32>,
    return
  }
}

</mosaic_0001>

<llo_original>
// kernel: tpu_custom_call.1
$region0: #{tpu_custom_call.1}
  #allocation0 [shape = 'u32[]', space=smem, size = 0x4, offset = 0x4, fixed_abs, tag = 'smem constant byte address 0x4 - core index']
  #allocation1 [shape = 'u32[144,128]{1,0:T(1,128)}', space=vmem, size = 0x12000, scoped, tag = 'internal scratch']
  %s0 = inlined_call_operand.vmem [shape: s32[8,1], index: 0, kind: input, shape index: {}]
  %s1 = inlined_call_operand.hbm [shape: f32[13,96], index: 1, kind: input, shape index: {}]
  %s2 = inlined_call_operand.hbm [shape: f32[32,96], index: 2, kind: input, shape index: {}]
  %s3 = inlined_call_operand.vmem [shape: f32[1,96], index: 3, kind: input, shape index: {}]
  %s4 = inlined_call_operand.vmem [shape: f32[1,96], index: 4, kind: input, shape index: {}]
  %s5 = inlined_call_operand.hbm [shape: f32[1,256], index: 5, kind: output, shape index: {}]
  %s6 = sld [smem:[#allocation0]]
  $region38: #{tpu_custom_call.1} parent=0
    _
  %s8 = ssub.s32 1, %s6
  %s9 = scalar_select 0, %s8, %s6
  $region1: #{tpu_custom_call.1} parent=0
    #allocation2 [shape = 'u8[8192]{0}', space=vmem, size = 0x2000, scoped, tag = 'input window, operand 1, single buffered']
    #allocation3 [shape = 's32[1]{0}', space=sflag, size = 0x4, scoped, tag = 'scoped memory for tpu_custom_call.1']
    #allocation4 [shape = 's32[1]{0}', space=sflag, size = 0x4, scoped, tag = 'scoped memory for tpu_custom_call.1']
    #allocation5 [shape = 'u8[16384]{0}', space=vmem, size = 0x4000, scoped, tag = 'input window, operand 2, single buffered']
    #allocation6 [shape = 's32[1]{0}', space=sflag, size = 0x4, scoped, tag = 'scoped memory for tpu_custom_call.1']
    #allocation7 [shape = 'u8[1024]{0}', space=vmem, size = 0x400, scoped, tag = 'output window, operand 0, single buffered']
    %10 = vsyncpa [#allocation3], 0
    %11 = vsyncpa [#allocation6], 0
    %12 = vsyncpa [#allocation4], 0
    // Predicated region
    $region2: #{tpu_custom_call.1} parent=1 // pred_check
      _
    $region3: #{tpu_custom_call.1} parent=1 // pred_check_branch
      %14 = sbr.rel (0) target = $region5
    $region4: #{tpu_custom_call.1} parent=1 // pred_region
      _
    $region5: #{tpu_custom_call.1} parent=1 // pred_fallthru
      _
    // Predicated region
    $region6: #{tpu_custom_call.1} parent=1 // pred_check
      _
    $region7: #{tpu_custom_call.1} parent=1 // pred_check_branch
      %16 = sbr.rel (0) target = $region9
    $region8: #{tpu_custom_call.1} parent=1 // pred_region
      %s18 = ssub.s32 256, 256
      %19 = vsyncadd [#allocation3], %s18
      %s20 = sshll.u32 [#allocation2], 4
      %s21 = int_to_ptr.vmem [resolvable:$true] %s20
      %26 = dma.hbm_to_vmem [thread:$0]  %s1, 256, %s21, [#allocation3], 128, 128, 8
    $region9: #{tpu_custom_call.1} parent=1 // pred_fallthru
      _
    // Predicated region
    $region10: #{tpu_custom_call.1} parent=1 // pred_check
      _
    $region11: #{tpu_custom_call.1} parent=1 // pred_check_branch
      %28 = sbr.rel (0) target = $region13
    $region12: #{tpu_custom_call.1} parent=1 // pred_region
      %s30 = ssub.s32 512, 512
      %31 = vsyncadd [#allocation6], %s30
      %s32 = sshll.u32 [#allocation5], 4
      %s33 = int_to_ptr.vmem [resolvable:$true] %s32
      %38 = dma.hbm_to_vmem [thread:$0]  %s2, 512, %s33, [#allocation6], 128, 128, 8
    $region13: #{tpu_custom_call.1} parent=1 // pred_fallthru
      _
    // Predicated region
    $region14: #{tpu_custom_call.1} parent=1 // pred_check
      _
    $region15: #{tpu_custom_call.1} parent=1 // pred_check_branch
      %40 = sbr.rel (0) target = $region17
    $region16: #{tpu_custom_call.1} parent=1 // pred_region
      _
    $region17: #{tpu_custom_call.1} parent=1 // pred_fallthru
      _
    // Predicated region
    $region18: #{tpu_custom_call.1} parent=1 // pred_check
      _
    $region19: #{tpu_custom_call.1} parent=1 // pred_check_branch
      %42 = sbr.rel (0) target = $region21
    $region20: #{tpu_custom_call.1} parent=1 // pred_region
      _
    $region21: #{tpu_custom_call.1} parent=1 // pred_fallthru
      _
    // Predicated region
    $region22: #{tpu_custom_call.1} parent=1 // pred_check
      _
    $region23: #{tpu_custom_call.1} parent=1 // pred_check_branch
      %44 = sbr.rel (0) target = $region25
    $region24: #{tpu_custom_call.1} parent=1 // pred_region
      %45 = dma.done [#allocation3], 256
    $region25: #{tpu_custom_call.1} parent=1 // pred_fallthru
      _
    // Predicated region
    $region26: #{tpu_custom_call.1} parent=1 // pred_check
      _
    $region27: #{tpu_custom_call.1} parent=1 // pred_check_branch
      %47 = sbr.rel (0) target = $region29
    $region28: #{tpu_custom_call.1} parent=1 // pred_region
      %48 = dma.done [#allocation6], 512
    $region29: #{tpu_custom_call.1} parent=1 // pred_fallthru
      _
    %v49 = vld [vmem:[%s0] sm:$0xff]
    %v50 = vlaneseq
    %v51 = vand.u32 %v50, 127
    %52 = vset.pattern.permute.xlu0 0
    %53 = vperm.xlu0 %52, %v49
    %v54 = vpop.permute.xlu0 %53
    %vm55 = vcmp.eq.s32.totalorder %v51, %v54
    %v56 = vsel %vm55, 1, 0
    %v57 = vcvt.s32.f32 %v56
    %v58 = vld [vmem:[#allocation2] sm:$0xff]
    %v59 = vld [vmem:[#allocation2 + $0x8] sm:$0x1f]
    %v60 = vld [vmem:[%s3] sm:$0x1]
    %v62 = vlaneseq
    %v63 = vshrl.u32 %v62, 7
    %v64 = vsub.s32 0, %v63
    %v65 = vrot.slane %v60, %v64
    %vm67 = vcmask 105472
    %v69 = vsel %vm67, %v57, 0
    %vm71 = vcmask 1044480
    %v73 = vsel %vm71, %v59, 0
    %75 = vmatprep.subr.mxu0 0.0
    %76 = vmatpush1.msra.mxu0 %v58
    %77 = vmatprep.subr.mxu0 0.0
    %78 = vmatpush1.msra.mxu0 %v73
    %79 = vmatprep.subr.mxu0 0.0
    %80 = vmatpush1.msra.mxu0 0.0
    %81 = vmatprep.subr.mxu0 0.0
    %82 = vmatpush1.msra.mxu0 0.0
    %83 = vmatprep.subr.mxu0 0.0
    %84 = vmatpush1.msra.mxu0 0.0
    %85 = vmatprep.subr.mxu0 0.0
    %86 = vmatpush1.msra.mxu0 0.0
    %87 = vmatprep.subr.mxu0 0.0
    %88 = vmatpush1.msra.mxu0 0.0
    %89 = vmatprep.subr.mxu0 0.0
    %90 = vmatpush1.msra.mxu0 0.0
    %91 = vmatprep.subr.mxu0 0.0
    %92 = vmatpush1.msra.mxu0 0.0
    %93 = vmatprep.subr.mxu0 0.0
    %94 = vmatpush1.msra.mxu0 0.0
    %95 = vmatprep.subr.mxu0 0.0
    %96 = vmatpush1.msra.mxu0 0.0
    %97 = vmatprep.subr.mxu0 0.0
    %98 = vmatpush1.msra.mxu0 0.0
    %99 = vmatprep.subr.mxu0 0.0
    %100 = vmatpush1.msra.mxu0 0.0
    %101 = vmatprep.subr.mxu0 0.0
    %102 = vmatpush1.msra.mxu0 0.0
    %103 = vmatprep.subr.mxu0 0.0
    %104 = vmatpush1.msra.mxu0 0.0
    %105 = vmatprep.subr.mxu0 0.0
    %106 = vmatpush1.msra.mxu0 0.0
    %107 = vmatprep.subr.mxu0 0.0
    %108 = vmatpush1.msra.mxu0 0.0
    %109 = vmatprep.subr.mxu0 0.0
    %110 = vmatpush1.msra.mxu0 0.0
    %111 = vmatprep.subr.mxu0 0.0
    %112 = vmatpush1.msra.mxu0 0.0
    %113 = vmatprep.subr.mxu0 0.0
    %114 = vmatpush1.msra.mxu0 0.0
    %115 = vmatprep.subr.mxu0 0.0
    %116 = vmatpush1.msra.mxu0 0.0
    %117 = vmatprep.subr.mxu0 0.0
    %118 = vmatpush1.msra.mxu0 0.0
    %119 = vmatprep.subr.mxu0 0.0
    %120 = vmatpush1.msra.mxu0 0.0
    %121 = vmatprep.subr.mxu0 0.0
    %122 = vmatpush1.msra.mxu0 0.0
    %123 = vmatprep.subr.mxu0 0.0
    %124 = vmatpush1.msra.mxu0 0.0
    %125 = vmatprep.subr.mxu0 0.0
    %126 = vmatpush1.msra.mxu0 0.0
    %127 = vmatprep.subr.mxu0 0.0
    %128 = vmatpush1.msra.mxu0 0.0
    %129 = vmatprep.subr.mxu0 0.0
    %130 = vmatpush1.msra.mxu0 0.0
    %131 = vmatprep.subr.mxu0 0.0
    %132 = vmatpush1.msra.mxu0 0.0
    %133 = vmatprep.subr.mxu0 0.0
    %134 = vmatpush1.msra.mxu0 0.0
    %135 = vmatprep.subr.mxu0 0.0
    %136 = vmatpush1.msra.mxu0 0.0
    %137 = vmatprep.subr.mxu0 0.0
    %138 = vmatpush1.msra.mxu0 0.0
    %139 = vmatprep.mubr.f32.mxu0 0.0
    %140 = vmatmul.mubr.f32.gmra.mrb[0].mxu0 %v69
    %v141 = vpop.f32.mrb[0].mxu0
    %v142 = vadd.f32 %v65, %v141
    %v143 = vpop.f32.mrb[0].mxu0
    %144 = vdwg.mxu0
    %v145 = vld [vmem:[#allocation5] sm:$0xff]
    %v146 = vld [vmem:[#allocation5 + $0x8] sm:$0xff]
    %v147 = vld [vmem:[#allocation5 + $0x10] sm:$0xff]
    %v148 = vld [vmem:[#allocation5 + $0x18] sm:$0xff]
    %v149 = vld [vmem:[%s4] sm:$0x1]
    %vm150 = vcmask 261120
    %v152 = vsel %vm150, 0.0, 0
    %154 = vmatprep.subr.mxu0 0.0
    %155 = vmatpush1.msra.mxu0 %v145
    %156 = vmatprep.subr.mxu0 0.0
    %157 = vmatpush1.msra.mxu0 %v146
    %158 = vmatprep.subr.mxu0 0.0
    %159 = vmatpush1.msra.mxu0 %v147
    %160 = vmatprep.subr.mxu0 0.0
    %161 = vmatpush1.msra.mxu0 %v148
    %162 = vmatprep.subr.mxu0 0.0
    %163 = vmatpush1.msra.mxu0 0.0
    %164 = vmatprep.subr.mxu0 0.0
    %165 = vmatpush1.msra.mxu0 0.0
    %166 = vmatprep.subr.mxu0 0.0
    %167 = vmatpush1.msra.mxu0 0.0
    %168 = vmatprep.subr.mxu0 0.0
    %169 = vmatpush1.msra.mxu0 0.0
    %170 = vmatprep.subr.mxu0 0.0
    %171 = vmatpush1.msra.mxu0 0.0
    %172 = vmatprep.subr.mxu0 0.0
    %173 = vmatpush1.msra.mxu0 0.0
    %174 = vmatprep.subr.mxu0 0.0
    %175 = vmatpush1.msra.mxu0 0.0
    %176 = vmatprep.subr.mxu0 0.0
    %177 = vmatpush1.msra.mxu0 0.0
    %178 = vmatprep.subr.mxu0 0.0
    %179 = vmatpush1.msra.mxu0 0.0
    %180 = vmatprep.subr.mxu0 0.0
    %181 = vmatpush1.msra.mxu0 0.0
    %182 = vmatprep.subr.mxu0 0.0
    %183 = vmatpush1.msra.mxu0 0.0
    %184 = vmatprep.subr.mxu0 0.0
    %185 = vmatpush1.msra.mxu0 0.0
    %186 = vmatprep.subr.mxu0 0.0
    %187 = vmatpush1.msra.mxu0 0.0
    %188 = vmatprep.subr.mxu0 0.0
    %189 = vmatpush1.msra.mxu0 0.0
    %190 = vmatprep.subr.mxu0 0.0
    %191 = vmatpush1.msra.mxu0 0.0
    %192 = vmatprep.subr.mxu0 0.0
    %193 = vmatpush1.msra.mxu0 0.0
    %194 = vmatprep.subr.mxu0 0.0
    %195 = vmatpush1.msra.mxu0 0.0
    %196 = vmatprep.subr.mxu0 0.0
    %197 = vmatpush1.msra.mxu0 0.0
    %198 = vmatprep.subr.mxu0 0.0
    %199 = vmatpush1.msra.mxu0 0.0
    %200 = vmatprep.subr.mxu0 0.0
    %201 = vmatpush1.msra.mxu0 0.0
    %202 = vmatprep.subr.mxu0 0.0
    %203 = vmatpush1.msra.mxu0 0.0
    %204 = vmatprep.subr.mxu0 0.0
    %205 = vmatpush1.msra.mxu0 0.0
    %206 = vmatprep.subr.mxu0 0.0
    %207 = vmatpush1.msra.mxu0 0.0
    %208 = vmatprep.subr.mxu0 0.0
    %209 = vmatpush1.msra.mxu0 0.0
    %210 = vmatprep.subr.mxu0 0.0
    %211 = vmatpush1.msra.mxu0 0.0
    %212 = vmatprep.subr.mxu0 0.0
    %213 = vmatpush1.msra.mxu0 0.0
    %214 = vmatprep.subr.mxu0 0.0
    %215 = vmatpush1.msra.mxu0 0.0
    %216 = vmatprep.subr.mxu0 0.0
    %217 = vmatpush1.msra.mxu0 0.0
    %218 = vmatprep.mubr.f32.mxu0 0.0
    %219 = vmatmul.mubr.f32.gmra.mrb[0].mxu0 %v152
    %v220 = vpop.f32.mrb[0].mxu0
    %v221 = vadd.f32 %v149, %v220
    %v222 = vpop.f32.mrb[0].mxu0
    %223 = vdwg.mxu0
    %v224 = vadd.f32 %v142, %v221
    %v225 = vxor.u32 %v224, 2147483648
    %v226 = vmul.f32 %v225, 1.442695
    %v227 = vpow.pop %v226
    %v228 = vadd.f32 %v227, 1.0
    %v229 = vrcp.pop %v228
    %v230 = vmul.f32 1.0, %v229
    %232 = vrot.lane.b32.xlu0 %v221, 64
    %v233 = vpop.permute.xlu0 %232
    %v235 = vmul.f32 %v230, %v233
    %237 = vrot.lane.b32.xlu0 %v235, 64
    %v238 = vpop.permute.xlu0 %237
    %v240 = vadd.f32 %v142, %v238
    %v241 = vtanh.pop %v240
    %v242 = vsub.f32 0.0, %v241
    %244 = vrot.lane.b32.xlu0 %v242, 96
    %v245 = vpop.permute.xlu0 %244
    %v247 = vmul.f32 %v230, %v245
    %249 = vrot.lane.b32.xlu0 %v247, 32
    %v250 = vpop.permute.xlu0 %249
    %v252 = vadd.f32 %v241, %v250
    %254 = vrot.lane.b32.xlu0 %v252, 64
    %v255 = vpop.permute.xlu0 %254
    %v256 = vsel %vm150, %v255, 0
    %258 = vmatprep.subr.mxu0 0.0
    %259 = vmatpush1.msra.mxu0 %v145
    %260 = vmatprep.subr.mxu0 0.0
    %261 = vmatpush1.msra.mxu0 %v146
    %262 = vmatprep.subr.mxu0 0.0
    %263 = vmatpush1.msra.mxu0 %v147
    %264 = vmatprep.subr.mxu0 0.0
    %265 = vmatpush1.msra.mxu0 %v148
    %266 = vmatprep.subr.mxu0 0.0
    %267 = vmatpush1.msra.mxu0 0.0
    %268 = vmatprep.subr.mxu0 0.0
    %269 = vmatpush1.msra.mxu0 0.0
    %270 = vmatprep.subr.mxu0 0.0
    %271 = vmatpush1.msra.mxu0 0.0
    %272 = vmatprep.subr.mxu0 0.0
    %273 = vmatpush1.msra.mxu0 0.0
    %274 = vmatprep.subr.mxu0 0.0
    %275 = vmatpush1.msra.mxu0 0.0
    %276 = vmatprep.subr.mxu0 0.0
    %277 = vmatpush1.msra.mxu0 0.0
    %278 = vmatprep.subr.mxu0 0.0
    %279 = vmatpush1.msra.mxu0 0.0
    %280 = vmatprep.subr.mxu0 0.0
    %281 = vmatpush1.msra.mxu0 0.0
    %282 = vmatprep.subr.mxu0 0.0
    %283 = vmatpush1.msra.mxu0 0.0
    %284 = vmatprep.subr.mxu0 0.0
    %285 = vmatpush1.msra.mxu0 0.0
    %286 = vmatprep.subr.mxu0 0.0
    %287 = vmatpush1.msra.mxu0 0.0
    %288 = vmatprep.subr.mxu0 0.0
    %289 = vmatpush1.msra.mxu0 0.0
    %290 = vmatprep.subr.mxu0 0.0
    %291 = vmatpush1.msra.mxu0 0.0
    %292 = vmatprep.subr.mxu0 0.0
    %293 = vmatpush1.msra.mxu0 0.0
    %294 = vmatprep.subr.mxu0 0.0
    %295 = vmatpush1.msra.mxu0 0.0
    %296 = vmatprep.subr.mxu0 0.0
    %297 = vmatpush1.msra.mxu0 0.0
    %298 = vmatprep.subr.mxu0 0.0
    %299 = vmatpush1.msra.mxu0 0.0
    %300 = vmatprep.subr.mxu0 0.0
    %301 = vmatpush1.msra.mxu0 0.0
    %302 = vmatprep.subr.mxu0 0.0
    %303 = vmatpush1.msra.mxu0 0.0
    %304 = vmatprep.subr.mxu0 0.0
    %305 = vmatpush1.msra.mxu0 0.0
    %306 = vmatprep.subr.mxu0 0.0
    %307 = vmatpush1.msra.mxu0 0.0
    %308 = vmatprep.subr.mxu0 0.0
    %309 = vmatpush1.msra.mxu0 0.0
    %310 = vmatprep.subr.mxu0 0.0
    %311 = vmatpush1.msra.mxu0 0.0
    %312 = vmatprep.subr.mxu0 0.0
    %313 = vmatpush1.msra.mxu0 0.0
    %314 = vmatprep.subr.mxu0 0.0
    %315 = vmatpush1.msra.mxu0 0.0
    %316 = vmatprep.subr.mxu0 0.0
    %317 = vmatpush1.msra.mxu0 0.0
    %318 = vmatprep.subr.mxu0 0.0
    %319 = vmatpush1.msra.mxu0 0.0
    %320 = vmatprep.subr.mxu0 0.0
    %321 = vmatpush1.msra.mxu0 0.0
    %322 = vmatprep.mubr.f32.mxu0 0.0
    %323 = vmatmul.mubr.f32.gmra.mrb[0].mxu0 %v256
    %v324 = vpop.f32.mrb[0].mxu0
    %v325 = vadd.f32 %v149, %v324
    %v326 = vpop.f32.mrb[0].mxu0
    %327 = vdwg.mxu0
    %v329 = vrot.slane %v325, 7
    %v331 = vadd.f32 %v142, %v329
    %v332 = vxor.u32 %v331, 2147483648
    %v333 = vmul.f32 %v332, 1.442695
    %v334 = vpow.pop %v333
    %v335 = vadd.f32 %v334, 1.0
    %v336 = vrcp.pop %v335
    %v337 = vmul.f32 1.0, %v336
    %338 = vrot.lane.b32.xlu0 %v329, 64
    %v339 = vpop.permute.xlu0 %338
    %v341 = vmul.f32 %v337, %v339
    %343 = vrot.lane.b32.xlu0 %v341, 64
    %v344 = vpop.permute.xlu0 %343
    %v346 = vadd.f32 %v142, %v344
    %v347 = vtanh.pop %v346
    %v349 = vrot.slane %v347, 1
    %v351 = vsub.f32 %v252, %v349
    %v353 = vrot.slane %v351, 7
    %354 = vrot.lane.b32.xlu0 %v353, 96
    %v355 = vpop.permute.xlu0 %354
    %v357 = vmul.f32 %v337, %v355
    %359 = vrot.lane.b32.xlu0 %v357, 32
    %v360 = vpop.permute.xlu0 %359
    %v362 = vadd.f32 %v347, %v360
    %v364 = vrot.slane %v362, 1
    %365 = vrot.lane.b32.xlu0 %v364, 64
    %v366 = vpop.permute.xlu0 %365
    %v367 = vsel %vm150, %v366, 0
    %369 = vmatprep.subr.mxu0 0.0
    %370 = vmatpush1.msra.mxu0 %v145
    %371 = vmatprep.subr.mxu0 0.0
    %372 = vmatpush1.msra.mxu0 %v146
    %373 = vmatprep.subr.mxu0 0.0
    %374 = vmatpush1.msra.mxu0 %v147
    %375 = vmatprep.subr.mxu0 0.0
    %376 = vmatpush1.msra.mxu0 %v148
    %377 = vmatprep.subr.mxu0 0.0
    %378 = vmatpush1.msra.mxu0 0.0
    %379 = vmatprep.subr.mxu0 0.0
    %380 = vmatpush1.msra.mxu0 0.0
    %381 = vmatprep.subr.mxu0 0.0
    %382 = vmatpush1.msra.mxu0 0.0
    %383 = vmatprep.subr.mxu0 0.0
    %384 = vmatpush1.msra.mxu0 0.0
    %385 = vmatprep.subr.mxu0 0.0
    %386 = vmatpush1.msra.mxu0 0.0
    %387 = vmatprep.subr.mxu0 0.0
    %388 = vmatpush1.msra.mxu0 0.0
    %389 = vmatprep.subr.mxu0 0.0
    %390 = vmatpush1.msra.mxu0 0.0
    %391 = vmatprep.subr.mxu0 0.0
    %392 = vmatpush1.msra.mxu0 0.0
    %393 = vmatprep.subr.mxu0 0.0
    %394 = vmatpush1.msra.mxu0 0.0
    %395 = vmatprep.subr.mxu0 0.0
    %396 = vmatpush1.msra.mxu0 0.0
    %397 = vmatprep.subr.mxu0 0.0
    %398 = vmatpush1.msra.mxu0 0.0
    %399 = vmatprep.subr.mxu0 0.0
    %400 = vmatpush1.msra.mxu0 0.0
    %401 = vmatprep.subr.mxu0 0.0
    %402 = vmatpush1.msra.mxu0 0.0
    %403 = vmatprep.subr.mxu0 0.0
    %404 = vmatpush1.msra.mxu0 0.0
    %405 = vmatprep.subr.mxu0 0.0
    %406 = vmatpush1.msra.mxu0 0.0
    %407 = vmatprep.subr.mxu0 0.0
    %408 = vmatpush1.msra.mxu0 0.0
    %409 = vmatprep.subr.mxu0 0.0
    %410 = vmatpush1.msra.mxu0 0.0
    %411 = vmatprep.subr.mxu0 0.0
    %412 = vmatpush1.msra.mxu0 0.0
    %413 = vmatprep.subr.mxu0 0.0
    %414 = vmatpush1.msra.mxu0 0.0
    %415 = vmatprep.subr.mxu0 0.0
    %416 = vmatpush1.msra.mxu0 0.0
    %417 = vmatprep.subr.mxu0 0.0
    %418 = vmatpush1.msra.mxu0 0.0
    %419 = vmatprep.subr.mxu0 0.0
    %420 = vmatpush1.msra.mxu0 0.0
    %421 = vmatprep.subr.mxu0 0.0
    %422 = vmatpush1.msra.mxu0 0.0
    %423 = vmatprep.subr.mxu0 0.0
    %424 = vmatpush1.msra.mxu0 0.0
    %425 = vmatprep.subr.mxu0 0.0
    %426 = vmatpush1.msra.mxu0 0.0
    %427 = vmatprep.subr.mxu0 0.0
    %428 = vmatpush1.msra.mxu0 0.0
    %429 = vmatprep.subr.mxu0 0.0
    %430 = vmatpush1.msra.mxu0 0.0
    %431 = vmatprep.subr.mxu0 0.0
    %432 = vmatpush1.msra.mxu0 0.0
    %433 = vmatprep.mubr.f32.mxu0 0.0
    %434 = vmatmul.mubr.f32.gmra.mrb[0].mxu0 %v367
    %v435 = vpop.f32.mrb[0].mxu0
    %v436 = vadd.f32 %v149, %v435
    %v437 = vpop.f32.mrb[0].mxu0
    %438 = vdwg.mxu0
    %v440 = vrot.slane %v436, 6
    %v442 = vadd.f32 %v142, %v440
    %v443 = vxor.u32 %v442, 2147483648
    %v444 = vmul.f32 %v443, 1.442695
    %v445 = vpow.pop %v444
    %v446 = vadd.f32 %v445, 1.0
    %v447 = vrcp.pop %v446
    %v448 = vmul.f32 1.0, %v447
    %449 = vrot.lane.b32.xlu0 %v440, 64
    %v450 = vpop.permute.xlu0 %449
    %v452 = vmul.f32 %v448, %v450
    %454 = vrot.lane.b32.xlu0 %v452, 64
    %v455 = vpop.permute.xlu0 %454
    %v457 = vadd.f32 %v142, %v455
    %v458 = vtanh.pop %v457
    %v460 = vrot.slane %v458, 1
    %v462 = vsub.f32 %v362, %v460
    %v464 = vrot.slane %v462, 7
    %465 = vrot.lane.b32.xlu0 %v464, 96
    %v466 = vpop.permute.xlu0 %465
    %v468 = vmul.f32 %v448, %v466
    %470 = vrot.lane.b32.xlu0 %v468, 32
    %v471 = vpop.permute.xlu0 %470
    %v473 = vadd.f32 %v458, %v471
    %v475 = vrot.slane %v473, 2
    %476 = vrot.lane.b32.xlu0 %v475, 64
    %v477 = vpop.permute.xlu0 %476
    %v478 = vsel %vm150, %v477, 0
    %480 = vmatprep.subr.mxu0 0.0
    %481 = vmatpush1.msra.mxu0 %v145
    %482 = vmatprep.subr.mxu0 0.0
    %483 = vmatpush1.msra.mxu0 %v146
    %484 = vmatprep.subr.mxu0 0.0
    %485 = vmatpush1.msra.mxu0 %v147
    %486 = vmatprep.subr.mxu0 0.0
    %487 = vmatpush1.msra.mxu0 %v148
    %488 = vmatprep.subr.mxu0 0.0
    %489 = vmatpush1.msra.mxu0 0.0
    %490 = vmatprep.subr.mxu0 0.0
    %491 = vmatpush1.msra.mxu0 0.0
    %492 = vmatprep.subr.mxu0 0.0
    %493 = vmatpush1.msra.mxu0 0.0
    %494 = vmatprep.subr.mxu0 0.0
    %495 = vmatpush1.msra.mxu0 0.0
    %496 = vmatprep.subr.mxu0 0.0
    %497 = vmatpush1.msra.mxu0 0.0
    %498 = vmatprep.subr.mxu0 0.0
    %499 = vmatpush1.msra.mxu0 0.0
    %500 = vmatprep.subr.mxu0 0.0
    %501 = vmatpush1.msra.mxu0 0.0
    %502 = vmatprep.subr.mxu0 0.0
    %503 = vmatpush1.msra.mxu0 0.0
    %504 = vmatprep.subr.mxu0 0.0
    %505 = vmatpush1.msra.mxu0 0.0
    %506 = vmatprep.subr.mxu0 0.0
    %507 = vmatpush1.msra.mxu0 0.0
    %508 = vmatprep.subr.mxu0 0.0
    %509 = vmatpush1.msra.mxu0 0.0
    %510 = vmatprep.subr.mxu0 0.0
    %511 = vmatpush1.msra.mxu0 0.0
    %512 = vmatprep.subr.mxu0 0.0
    %513 = vmatpush1.msra.mxu0 0.0
    %514 = vmatprep.subr.mxu0 0.0
    %515 = vmatpush1.msra.mxu0 0.0
    %516 = vmatprep.subr.mxu0 0.0
    %517 = vmatpush1.msra.mxu0 0.0
    %518 = vmatprep.subr.mxu0 0.0
    %519 = vmatpush1.msra.mxu0 0.0
    %520 = vmatprep.subr.mxu0 0.0
    %521 = vmatpush1.msra.mxu0 0.0
    %522 = vmatprep.subr.mxu0 0.0
    %523 = vmatpush1.msra.mxu0 0.0
    %524 = vmatprep.subr.mxu0 0.0
    %525 = vmatpush1.msra.mxu0 0.0
    %526 = vmatprep.subr.mxu0 0.0
    %527 = vmatpush1.msra.mxu0 0.0
    %528 = vmatprep.subr.mxu0 0.0
    %529 = vmatpush1.msra.mxu0 0.0
    %530 = vmatprep.subr.mxu0 0.0
    %531 = vmatpush1.msra.mxu0 0.0
    %532 = vmatprep.subr.mxu0 0.0
    %533 = vmatpush1.msra.mxu0 0.0
    %534 = vmatprep.subr.mxu0 0.0
    %535 = vmatpush1.msra.mxu0 0.0
    %536 = vmatprep.subr.mxu0 0.0
    %537 = vmatpush1.msra.mxu0 0.0
    %538 = vmatprep.subr.mxu0 0.0
    %539 = vmatpush1.msra.mxu0 0.0
    %540 = vmatprep.subr.mxu0 0.0
    %541 = vmatpush1.msra.mxu0 0.0
    %542 = vmatprep.subr.mxu0 0.0
    %543 = vmatpush1.msra.mxu0 0.0
    %544 = vmatprep.mubr.f32.mxu0 0.0
    %545 = vmatmul.mubr.f32.gmra.mrb[0].mxu0 %v478
    %v546 = vpop.f32.mrb[0].mxu0
    %v547 = vadd.f32 %v149, %v546
    %v548 = vpop.f32.mrb[0].mxu0
    %549 = vdwg.mxu0
    %v551 = vrot.slane %v547, 5
    %v553 = vadd.f32 %v142, %v551
    %v554 = vxor.u32 %v553, 2147483648
    %v555 = vmul.f32 %v554, 1.442695
    %v556 = vpow.pop %v555
    %v557 = vadd.f32 %v556, 1.0
    %v558 = vrcp.pop %v557
    %v559 = vmul.f32 1.0, %v558
    %560 = vrot.lane.b32.xlu0 %v551, 64
    %v561 = vpop.permute.xlu0 %560
    %v563 = vmul.f32 %v559, %v561
    %565 = vrot.lane.b32.xlu0 %v563, 64
    %v566 = vpop.permute.xlu0 %565
    %v568 = vadd.f32 %v142, %v566
    %v569 = vtanh.pop %v568
    %v571 = vrot.slane %v569, 1
    %v573 = vsub.f32 %v473, %v571
    %v575 = vrot.slane %v573, 7
    %576 = vrot.lane.b32.xlu0 %v575, 96
    %v577 = vpop.permute.xlu0 %576
    %v579 = vmul.f32 %v559, %v577
    %581 = vrot.lane.b32.xlu0 %v579, 32
    %v582 = vpop.permute.xlu0 %581
    %v584 = vadd.f32 %v569, %v582
    %v586 = vrot.slane %v584, 3
    %587 = vrot.lane.b32.xlu0 %v586, 64
    %v588 = vpop.permute.xlu0 %587
    %v589 = vsel %vm150, %v588, 0
    %591 = vmatprep.subr.mxu0 0.0
    %592 = vmatpush1.msra.mxu0 %v145
    %593 = vmatprep.subr.mxu0 0.0
    %594 = vmatpush1.msra.mxu0 %v146
    %595 = vmatprep.subr.mxu0 0.0
    %596 = vmatpush1.msra.mxu0 %v147
    %597 = vmatprep.subr.mxu0 0.0
    %598 = vmatpush1.msra.mxu0 %v148
    %599 = vmatprep.subr.mxu0 0.0
    %600 = vmatpush1.msra.mxu0 0.0
    %601 = vmatprep.subr.mxu0 0.0
    %602 = vmatpush1.msra.mxu0 0.0
    %603 = vmatprep.subr.mxu0 0.0
    %604 = vmatpush1.msra.mxu0 0.0
    %605 = vmatprep.subr.mxu0 0.0
    %606 = vmatpush1.msra.mxu0 0.0
    %607 = vmatprep.subr.mxu0 0.0
    %608 = vmatpush1.msra.mxu0 0.0
    %609 = vmatprep.subr.mxu0 0.0
    %610 = vmatpush1.msra.mxu0 0.0
    %611 = vmatprep.subr.mxu0 0.0
    %612 = vmatpush1.msra.mxu0 0.0
    %613 = vmatprep.subr.mxu0 0.0
    %614 = vmatpush1.msra.mxu0 0.0
    %615 = vmatprep.subr.mxu0 0.0
    %616 = vmatpush1.msra.mxu0 0.0
    %617 = vmatprep.subr.mxu0 0.0
    %618 = vmatpush1.msra.mxu0 0.0
    %619 = vmatprep.subr.mxu0 0.0
    %620 = vmatpush1.msra.mxu0 0.0
    %621 = vmatprep.subr.mxu0 0.0
    %622 = vmatpush1.msra.mxu0 0.0
    %623 = vmatprep.subr.mxu0 0.0
    %624 = vmatpush1.msra.mxu0 0.0
    %625 = vmatprep.subr.mxu0 0.0
    %626 = vmatpush1.msra.mxu0 0.0
    %627 = vmatprep.subr.mxu0 0.0
    %628 = vmatpush1.msra.mxu0 0.0
    %629 = vmatprep.subr.mxu0 0.0
    %630 = vmatpush1.msra.mxu0 0.0
    %631 = vmatprep.subr.mxu0 0.0
    %632 = vmatpush1.msra.mxu0 0.0
    %633 = vmatprep.subr.mxu0 0.0
    %634 = vmatpush1.msra.mxu0 0.0
    %635 = vmatprep.subr.mxu0 0.0
    %636 = vmatpush1.msra.mxu0 0.0
    %637 = vmatprep.subr.mxu0 0.0
    %638 = vmatpush1.msra.mxu0 0.0
    %639 = vmatprep.subr.mxu0 0.0
    %640 = vmatpush1.msra.mxu0 0.0
    %641 = vmatprep.subr.mxu0 0.0
    %642 = vmatpush1.msra.mxu0 0.0
    %643 = vmatprep.subr.mxu0 0.0
    %644 = vmatpush1.msra.mxu0 0.0
    %645 = vmatprep.subr.mxu0 0.0
    %646 = vmatpush1.msra.mxu0 0.0
    %647 = vmatprep.subr.mxu0 0.0
    %648 = vmatpush1.msra.mxu0 0.0
    %649 = vmatprep.subr.mxu0 0.0
    %650 = vmatpush1.msra.mxu0 0.0
    %651 = vmatprep.subr.mxu0 0.0
    %652 = vmatpush1.msra.mxu0 0.0
    %653 = vmatprep.subr.mxu0 0.0
    %654 = vmatpush1.msra.mxu0 0.0
    %655 = vmatprep.mubr.f32.mxu0 0.0
    %656 = vmatmul.mubr.f32.gmra.mrb[0].mxu0 %v589
    %v657 = vpop.f32.mrb[0].mxu0
    %v658 = vadd.f32 %v149, %v657
    %v659 = vpop.f32.mrb[0].mxu0
    %660 = vdwg.mxu0
    %v662 = vrot.slane %v658, 4
    %v664 = vadd.f32 %v142, %v662
    %v665 = vxor.u32 %v664, 2147483648
    %v666 = vmul.f32 %v665, 1.442695
    %v667 = vpow.pop %v666
    %v668 = vadd.f32 %v667, 1.0
    %v669 = vrcp.pop %v668
    %v670 = vmul.f32 1.0, %v669
    %671 = vrot.lane.b32.xlu0 %v662, 64
    %v672 = vpop.permute.xlu0 %671
    %v674 = vmul.f32 %v670, %v672
    %676 = vrot.lane.b32.xlu0 %v674, 64
    %v677 = vpop.permute.xlu0 %676
    %v679 = vadd.f32 %v142, %v677
    %v680 = vtanh.pop %v679
    %v682 = vrot.slane %v680, 1
    %v684 = vsub.f32 %v584, %v682
    %v686 = vrot.slane %v684, 7
    %687 = vrot.lane.b32.xlu0 %v686, 96
    %v688 = vpop.permute.xlu0 %687
    %v690 = vmul.f32 %v670, %v688
    %692 = vrot.lane.b32.xlu0 %v690, 32
    %v693 = vpop.permute.xlu0 %692
    %v695 = vadd.f32 %v680, %v693
    %v697 = vrot.slane %v695, 4
    %698 = vrot.lane.b32.xlu0 %v697, 64
    %v699 = vpop.permute.xlu0 %698
    %v700 = vsel %vm150, %v699, 0
    %702 = vmatprep.subr.mxu0 0.0
    %703 = vmatpush1.msra.mxu0 %v145
    %704 = vmatprep.subr.mxu0 0.0
    %705 = vmatpush1.msra.mxu0 %v146
    %706 = vmatprep.subr.mxu0 0.0
    %707 = vmatpush1.msra.mxu0 %v147
    %708 = vmatprep.subr.mxu0 0.0
    %709 = vmatpush1.msra.mxu0 %v148
    %710 = vmatprep.subr.mxu0 0.0
    %711 = vmatpush1.msra.mxu0 0.0
    %712 = vmatprep.subr.mxu0 0.0
    %713 = vmatpush1.msra.mxu0 0.0
    %714 = vmatprep.subr.mxu0 0.0
    %715 = vmatpush1.msra.mxu0 0.0
    %716 = vmatprep.subr.mxu0 0.0
    %717 = vmatpush1.msra.mxu0 0.0
    %718 = vmatprep.subr.mxu0 0.0
    %719 = vmatpush1.msra.mxu0 0.0
    %720 = vmatprep.subr.mxu0 0.0
    %721 = vmatpush1.msra.mxu0 0.0
    %722 = vmatprep.subr.mxu0 0.0
    %723 = vmatpush1.msra.mxu0 0.0
    %724 = vmatprep.subr.mxu0 0.0
    %725 = vmatpush1.msra.mxu0 0.0
    %726 = vmatprep.subr.mxu0 0.0
    %727 = vmatpush1.msra.mxu0 0.0
    %728 = vmatprep.subr.mxu0 0.0
    %729 = vmatpush1.msra.mxu0 0.0
    %730 = vmatprep.subr.mxu0 0.0
    %731 = vmatpush1.msra.mxu0 0.0
    %732 = vmatprep.subr.mxu0 0.0
    %733 = vmatpush1.msra.mxu0 0.0
    %734 = vmatprep.subr.mxu0 0.0
    %735 = vmatpush1.msra.mxu0 0.0
    %736 = vmatprep.subr.mxu0 0.0
    %737 = vmatpush1.msra.mxu0 0.0
    %738 = vmatprep.subr.mxu0 0.0
    %739 = vmatpush1.msra.mxu0 0.0
    %740 = vmatprep.subr.mxu0 0.0
    %741 = vmatpush1.msra.mxu0 0.0
    %742 = vmatprep.subr.mxu0 0.0
    %743 = vmatpush1.msra.mxu0 0.0
    %744 = vmatprep.subr.mxu0 0.0
    %745 = vmatpush1.msra.mxu0 0.0
    %746 = vmatprep.subr.mxu0 0.0
    %747 = vmatpush1.msra.mxu0 0.0
    %748 = vmatprep.subr.mxu0 0.0
    %749 = vmatpush1.msra.mxu0 0.0
    %750 = vmatprep.subr.mxu0 0.0
    %751 = vmatpush1.msra.mxu0 0.0
    %752 = vmatprep.subr.mxu0 0.0
    %753 = vmatpush1.msra.mxu0 0.0
    %754 = vmatprep.subr.mxu0 0.0
    %755 = vmatpush1.msra.mxu0 0.0
    %756 = vmatprep.subr.mxu0 0.0
    %757 = vmatpush1.msra.mxu0 0.0
    %758 = vmatprep.subr.mxu0 0.0
    %759 = vmatpush1.msra.mxu0 0.0
    %760 = vmatprep.subr.mxu0 0.0
    %761 = vmatpush1.msra.mxu0 0.0
    %762 = vmatprep.subr.mxu0 0.0
    %763 = vmatpush1.msra.mxu0 0.0
    %764 = vmatprep.subr.mxu0 0.0
    %765 = vmatpush1.msra.mxu0 0.0
    %766 = vmatprep.mubr.f32.mxu0 0.0
    %767 = vmatmul.mubr.f32.gmra.mrb[0].mxu0 %v700
    %v768 = vpop.f32.mrb[0].mxu0
    %v769 = vadd.f32 %v149, %v768
    %v770 = vpop.f32.mrb[0].mxu0
    %771 = vdwg.mxu0
    %v773 = vrot.slane %v769, 3
    %v775 = vadd.f32 %v142, %v773
    %v776 = vxor.u32 %v775, 2147483648
    %v777 = vmul.f32 %v776, 1.442695
    %v778 = vpow.pop %v777
    %v779 = vadd.f32 %v778, 1.0
    %v780 = vrcp.pop %v779
    %v781 = vmul.f32 1.0, %v780
    %782 = vrot.lane.b32.xlu0 %v773, 64
    %v783 = vpop.permute.xlu0 %782
    %v785 = vmul.f32 %v781, %v783
    %787 = vrot.lane.b32.xlu0 %v785, 64
    %v788 = vpop.permute.xlu0 %787
    %v790 = vadd.f32 %v142, %v788
    %v791 = vtanh.pop %v790
    %v793 = vrot.slane %v791, 1
    %v795 = vsub.f32 %v695, %v793
    %v797 = vrot.slane %v795, 7
    %798 = vrot.lane.b32.xlu0 %v797, 96
    %v799 = vpop.permute.xlu0 %798
    %v801 = vmul.f32 %v781, %v799
    %803 = vrot.lane.b32.xlu0 %v801, 32
    %v804 = vpop.permute.xlu0 %803
    %v806 = vadd.f32 %v791, %v804
    %v808 = vrot.slane %v806, 5
    %809 = vrot.lane.b32.xlu0 %v808, 64
    %v810 = vpop.permute.xlu0 %809
    %v811 = vsel %vm150, %v810, 0
    %813 = vmatprep.subr.mxu0 0.0
    %814 = vmatpush1.msra.mxu0 %v145
    %815 = vmatprep.subr.mxu0 0.0
    %816 = vmatpush1.msra.mxu0 %v146
    %817 = vmatprep.subr.mxu0 0.0
    %818 = vmatpush1.msra.mxu0 %v147
    %819 = vmatprep.subr.mxu0 0.0
    %820 = vmatpush1.msra.mxu0 %v148
    %821 = vmatprep.subr.mxu0 0.0
    %822 = vmatpush1.msra.mxu0 0.0
    %823 = vmatprep.subr.mxu0 0.0
    %824 = vmatpush1.msra.mxu0 0.0
    %825 = vmatprep.subr.mxu0 0.0
    %826 = vmatpush1.msra.mxu0 0.0
    %827 = vmatprep.subr.mxu0 0.0
    %828 = vmatpush1.msra.mxu0 0.0
    %829 = vmatprep.subr.mxu0 0.0
    %830 = vmatpush1.msra.mxu0 0.0
    %831 = vmatprep.subr.mxu0 0.0
    %832 = vmatpush1.msra.mxu0 0.0
    %833 = vmatprep.subr.mxu0 0.0
    %834 = vmatpush1.msra.mxu0 0.0
    %835 = vmatprep.subr.mxu0 0.0
    %836 = vmatpush1.msra.mxu0 0.0
    %837 = vmatprep.subr.mxu0 0.0
    %838 = vmatpush1.msra.mxu0 0.0
    %839 = vmatprep.subr.mxu0 0.0
    %840 = vmatpush1.msra.mxu0 0.0
    %841 = vmatprep.subr.mxu0 0.0
    %842 = vmatpush1.msra.mxu0 0.0
    %843 = vmatprep.subr.mxu0 0.0
    %844 = vmatpush1.msra.mxu0 0.0
    %845 = vmatprep.subr.mxu0 0.0
    %846 = vmatpush1.msra.mxu0 0.0
    %847 = vmatprep.subr.mxu0 0.0
    %848 = vmatpush1.msra.mxu0 0.0
    %849 = vmatprep.subr.mxu0 0.0
    %850 = vmatpush1.msra.mxu0 0.0
    %851 = vmatprep.subr.mxu0 0.0
    %852 = vmatpush1.msra.mxu0 0.0
    %853 = vmatprep.subr.mxu0 0.0
    %854 = vmatpush1.msra.mxu0 0.0
    %855 = vmatprep.subr.mxu0 0.0
    %856 = vmatpush1.msra.mxu0 0.0
    %857 = vmatprep.subr.mxu0 0.0
    %858 = vmatpush1.msra.mxu0 0.0
    %859 = vmatprep.subr.mxu0 0.0
    %860 = vmatpush1.msra.mxu0 0.0
    %861 = vmatprep.subr.mxu0 0.0
    %862 = vmatpush1.msra.mxu0 0.0
    %863 = vmatprep.subr.mxu0 0.0
    %864 = vmatpush1.msra.mxu0 0.0
    %865 = vmatprep.subr.mxu0 0.0
    %866 = vmatpush1.msra.mxu0 0.0
    %867 = vmatprep.subr.mxu0 0.0
    %868 = vmatpush1.msra.mxu0 0.0
    %869 = vmatprep.subr.mxu0 0.0
    %870 = vmatpush1.msra.mxu0 0.0
    %871 = vmatprep.subr.mxu0 0.0
    %872 = vmatpush1.msra.mxu0 0.0
    %873 = vmatprep.subr.mxu0 0.0
    %874 = vmatpush1.msra.mxu0 0.0
    %875 = vmatprep.subr.mxu0 0.0
    %876 = vmatpush1.msra.mxu0 0.0
    %877 = vmatprep.mubr.f32.mxu0 0.0
    %878 = vmatmul.mubr.f32.gmra.mrb[0].mxu0 %v811
    %v879 = vpop.f32.mrb[0].mxu0
    %v880 = vadd.f32 %v149, %v879
    %v881 = vpop.f32.mrb[0].mxu0
    %882 = vdwg.mxu0
    %v884 = vrot.slane %v880, 2
    %v886 = vadd.f32 %v142, %v884
    %v887 = vxor.u32 %v886, 2147483648
    %v888 = vmul.f32 %v887, 1.442695
    %v889 = vpow.pop %v888
    %v890 = vadd.f32 %v889, 1.0
    %v891 = vrcp.pop %v890
    %v892 = vmul.f32 1.0, %v891
    %893 = vrot.lane.b32.xlu0 %v884, 64
    %v894 = vpop.permute.xlu0 %893
    %v896 = vmul.f32 %v892, %v894
    %898 = vrot.lane.b32.xlu0 %v896, 64
    %v899 = vpop.permute.xlu0 %898
    %v901 = vadd.f32 %v142, %v899
    %v902 = vtanh.pop %v901
    %v904 = vrot.slane %v902, 1
    %v906 = vsub.f32 %v806, %v904
    %v908 = vrot.slane %v906, 7
    %909 = vrot.lane.b32.xlu0 %v908, 96
    %v910 = vpop.permute.xlu0 %909
    %v912 = vmul.f32 %v892, %v910
    %914 = vrot.lane.b32.xlu0 %v912, 32
    %v915 = vpop.permute.xlu0 %914
    %v917 = vadd.f32 %v902, %v915
    %v919 = vrot.slane %v917, 6
    %920 = vrot.lane.b32.xlu0 %v919, 64
    %v921 = vpop.permute.xlu0 %920
    %v922 = vsel %vm150, %v921, 0
    %924 = vmatprep.subr.mxu0 0.0
    %925 = vmatpush1.msra.mxu0 %v145
    %926 = vmatprep.subr.mxu0 0.0
    %927 = vmatpush1.msra.mxu0 %v146
    %928 = vmatprep.subr.mxu0 0.0
    %929 = vmatpush1.msra.mxu0 %v147
    %930 = vmatprep.subr.mxu0 0.0
    %931 = vmatpush1.msra.mxu0 %v148
    %932 = vmatprep.subr.mxu0 0.0
    %933 = vmatpush1.msra.mxu0 0.0
    %934 = vmatprep.subr.mxu0 0.0
    %935 = vmatpush1.msra.mxu0 0.0
    %936 = vmatprep.subr.mxu0 0.0
    %937 = vmatpush1.msra.mxu0 0.0
    %938 = vmatprep.subr.mxu0 0.0
    %939 = vmatpush1.msra.mxu0 0.0
    %940 = vmatprep.subr.mxu0 0.0
    %941 = vmatpush1.msra.mxu0 0.0
    %942 = vmatprep.subr.mxu0 0.0
    %943 = vmatpush1.msra.mxu0 0.0
    %944 = vmatprep.subr.mxu0 0.0
    %945 = vmatpush1.msra.mxu0 0.0
    %946 = vmatprep.subr.mxu0 0.0
    %947 = vmatpush1.msra.mxu0 0.0
    %948 = vmatprep.subr.mxu0 0.0
    %949 = vmatpush1.msra.mxu0 0.0
    %950 = vmatprep.subr.mxu0 0.0
    %951 = vmatpush1.msra.mxu0 0.0
    %952 = vmatprep.subr.mxu0 0.0
    %953 = vmatpush1.msra.mxu0 0.0
    %954 = vmatprep.subr.mxu0 0.0
    %955 = vmatpush1.msra.mxu0 0.0
    %956 = vmatprep.subr.mxu0 0.0
    %957 = vmatpush1.msra.mxu0 0.0
    %958 = vmatprep.subr.mxu0 0.0
    %959 = vmatpush1.msra.mxu0 0.0
    %960 = vmatprep.subr.mxu0 0.0
    %961 = vmatpush1.msra.mxu0 0.0
    %962 = vmatprep.subr.mxu0 0.0
    %963 = vmatpush1.msra.mxu0 0.0
    %964 = vmatprep.subr.mxu0 0.0
    %965 = vmatpush1.msra.mxu0 0.0
    %966 = vmatprep.subr.mxu0 0.0
    %967 = vmatpush1.msra.mxu0 0.0
    %968 = vmatprep.subr.mxu0 0.0
    %969 = vmatpush1.msra.mxu0 0.0
    %970 = vmatprep.subr.mxu0 0.0
    %971 = vmatpush1.msra.mxu0 0.0
    %972 = vmatprep.subr.mxu0 0.0
    %973 = vmatpush1.msra.mxu0 0.0
    %974 = vmatprep.subr.mxu0 0.0
    %975 = vmatpush1.msra.mxu0 0.0
    %976 = vmatprep.subr.mxu0 0.0
    %977 = vmatpush1.msra.mxu0 0.0
    %978 = vmatprep.subr.mxu0 0.0
    %979 = vmatpush1.msra.mxu0 0.0
    %980 = vmatprep.subr.mxu0 0.0
    %981 = vmatpush1.msra.mxu0 0.0
    %982 = vmatprep.subr.mxu0 0.0
    %983 = vmatpush1.msra.mxu0 0.0
    %984 = vmatprep.subr.mxu0 0.0
    %985 = vmatpush1.msra.mxu0 0.0
    %986 = vmatprep.subr.mxu0 0.0
    %987 = vmatpush1.msra.mxu0 0.0
    %988 = vmatprep.mubr.f32.mxu0 0.0
    %989 = vmatmul.mubr.f32.gmra.mrb[0].mxu0 %v922
    %v990 = vpop.f32.mrb[0].mxu0
    %v991 = vadd.f32 %v149, %v990
    %v992 = vpop.f32.mrb[0].mxu0
    %993 = vdwg.mxu0
    %v995 = vrot.slane %v991, 1
    %v997 = vadd.f32 %v142, %v995
    %v998 = vxor.u32 %v997, 2147483648
    %v999 = vmul.f32 %v998, 1.442695
    %v1000 = vpow.pop %v999
    %v1001 = vadd.f32 %v1000, 1.0
    %v1002 = vrcp.pop %v1001
    %v1003 = vmul.f32 1.0, %v1002
    %1004 = vrot.lane.b32.xlu0 %v995, 64
    %v1005 = vpop.permute.xlu0 %1004
    %v1007 = vmul.f32 %v1003, %v1005
    %1009 = vrot.lane.b32.xlu0 %v1007, 64
    %v1010 = vpop.permute.xlu0 %1009
    %v1012 = vadd.f32 %v142, %v1010
    %v1013 = vtanh.pop %v1012
    %v1015 = vrot.slane %v1013, 1
    %v1017 = vsub.f32 %v917, %v1015
    %v1019 = vrot.slane %v1017, 7
    %1020 = vrot.lane.b32.xlu0 %v1019, 96
    %v1021 = vpop.permute.xlu0 %1020
    %v1023 = vmul.f32 %v1003, %v1021
    %1025 = vrot.lane.b32.xlu0 %v1023, 32
    %v1026 = vpop.permute.xlu0 %1025
    %v1028 = vadd.f32 %v1013, %v1026
    %1030 = vrot.lane.b32.xlu0 %v364, 96
    %v1031 = vpop.permute.xlu0 %1030
    %1034 = vrot.lane.b32.xlu0 %v586, 32
    %v1035 = vpop.permute.xlu0 %1034
    %1038 = vrot.lane.b32.xlu0 %v808, 96
    %v1039 = vpop.permute.xlu0 %1038
    %v1043 = vrot.slane %v1028, 7
    %1044 = vrot.lane.b32.xlu0 %v1043, 32
    %v1045 = vpop.permute.xlu0 %1044
    %v1047 = vsel %vm150, %v255, %v1031
    %vm1048 = vcmask 523264
    %v1049 = vsel %vm1048, %v1047, %v475
    %vm1050 = vcmask 785408
    %v1051 = vsel %vm1050, %v1049, %v1035
    %v1052 = vsel %vm150, %v699, %v1039
    %v1053 = vsel %vm1048, %v1052, %v919
    %v1054 = vsel %vm1050, %v1053, %v1045
    %v1057 = vcombine.low %v1051, %v1054
    %v1059 = vunpack.c.l.s4 1966171168
    %v1060 = vunpack.c.0.s8 %v1059
    %v1061 = vlaneseq
    %v1062 = vshrl.u32 %v1061, 7
    %v1063 = vsub.s32 %v1060, %v1062
    %v1064 = vrot.slane %v1057, %v1063
    %v1066 = vunpack.c.l.s4 1966171168
    %v1067 = vunpack.c.0.s8 %v1066
    %v1068 = vlaneseq
    %v1069 = vshrl.u32 %v1068, 7
    %v1070 = vsub.s32 %v1067, %v1069
    %v1071 = vrot.slane %v1064, %v1070
    %v1073 = vlaneseq
    %vm1074 = vcmp.ge.s32.totalorder %v1073, 0
    %vm1075 = vcmp.lt.s32.totalorder %v1073, 256
    %vm1076 = vmand %vm1074, %vm1075
    %1077 = vst.msk [vmem:[#allocation7] sm:$0x3] %vm1076, %v1071
    // Predicated region
    $region30: #{tpu_custom_call.1} parent=1 // pred_check
      _
    $region31: #{tpu_custom_call.1} parent=1 // pred_check_branch
      %1079 = sbr.rel (0) target = $region33
    $region32: #{tpu_custom_call.1} parent=1 // pred_region
      %s1081 = ssub.s32 32, 32
      %1082 = vsyncadd [#allocation4], %s1081
      %s1084 = sshll.u32 [#allocation7], 4
      %s1085 = int_to_ptr.vmem [resolvable:$true] %s1084
      %1087 = dma.vmem_to_hbm [thread:$0]  %s1085, 32, %s5, [#allocation4]
    $region33: #{tpu_custom_call.1} parent=1 // pred_fallthru
      _
    // Predicated region
    $region34: #{tpu_custom_call.1} parent=1 // pred_check
      _
    $region35: #{tpu_custom_call.1} parent=1 // pred_check_branch
      %1089 = sbr.rel (0) target = $region37
    $region36: #{tpu_custom_call.1} parent=1 // pred_region
      %1090 = dma.done [#allocation4], 32
    $region37: #{tpu_custom_call.1} parent=1 // pred_fallthru
      _
    %1091 = vsyncpa [#allocation3], 1
    %1092 = vsyncpa [#allocation6], 1
    %1093 = vsyncpa [#allocation4], 1

</llo_original>
